<compile_context>
chip_gen: v7x
topology: tpu7x:2x2x1
jax: 0.10.0
libtpu: 0.0.40
codegen_flags: <defaults>
</compile_context>

<pallas_src>
import jax
import jax.numpy as jnp
from jax.experimental import pallas as pl
from jax.experimental.pallas import tpu as pltpu


def _round_up(x, m):
    return (x + m - 1) // m * m


def _spec(shape, idx, single_buffer):
    # constant index map over the whole grid -> one buffer, fetched once
    if single_buffer:
        return pl.BlockSpec(shape, idx, pipeline_mode=pl.Buffered(1))
    return pl.BlockSpec(shape, idx)


def _embed_kernel(patches_ref, w_ref, pos_ref, out_ref):
    # patches_ref: (1, ts, K_pad) bf16 patches; seq row 0 is an all-zero "class" row
    # w_ref:       (K_pad, tn)    bf16 flattened conv weight tile
    # pos_ref:     (ts, tn)       f32 position(+class) embedding tile
    # out_ref:     (1, ts, tn)    output tile
    pe = jnp.dot(patches_ref[0], w_ref[...], preferred_element_type=jnp.float32)
    out_ref[0] = (pe + pos_ref[...]).astype(out_ref.dtype)   # single aligned store


def partclipseg_vision_embeddings(pixel_values, conv_weight, class_embedding,
                                  position_embedding, patch_size,
                                  compute_dtype=jnp.bfloat16,
                                  out_dtype=None,
                                  slice_output=True):
    """pixel_values: (B, C, H, W) NCHW, conv_weight: (D, C, P, P),
    class_embedding: (D,), position_embedding: (Np+1, D).

    Inputs are cast to bf16 for the MXU matmul (f32 accumulation); not bitwise
    identical to a pure-f32 torch Conv2d.  Set slice_output=False to get the
    padded (B, S_pad, D_pad) buffer and avoid the post-kernel slice copy.
    """
    B, C, H, W = pixel_values.shape
    D = conv_weight.shape[0]
    P = patch_size
    Hp, Wp = H // P, W // P
    Np = Hp * Wp
    K = C * P * P
    S = Np + 1                                   # class token + patches

    assert position_embedding.shape[0] == S, (
        "only the no-interpolation path (seq == num_positions) is implemented")
    # TODO(synk): bicubic interpolate_position_embeddings path not implemented
    # (torch.nn.functional.interpolate bicubic has no clean Pallas equivalent).

    out_dtype = pixel_values.dtype if out_dtype is None else out_dtype
    out_isz = jnp.dtype(out_dtype).itemsize

    # ---- tile-friendly padded sizes / tile selection ----
    K_pad = _round_up(K, 128)
    D_pad = _round_up(D, 128)

    weight_bytes = K_pad * D_pad * 2
    if weight_bytes <= (8 << 20):
        tn = D_pad                       # whole weight resident -> DMA'd once
    elif D_pad % 512 == 0:
        tn = 512
    elif D_pad % 256 == 0:
        tn = 256
    else:
        tn = 128
    n_d = D_pad // tn

    # seq tile: multiple of 16 (bf16 sublane packing)
    ts = _round_up(S, 16) if S <= 512 else 256
    if B == 1 and n_d == 1 and _round_up(S, ts) == ts and S > 16:
        # v7x megacore: guarantee >= 2 parallel grid steps for single images
        ts = _round_up((S + 1) // 2, 16)

    def _vmem_bytes(ts_):
        return (2 * ts_ * K_pad * 2                         # patches, 2 bufs
                + (1 if n_d == 1 else 2) * K_pad * tn * 2   # weight
                + 2 * ts_ * tn * 4                          # pos (conservative)
                + 2 * ts_ * tn * out_isz)                   # output, 2 bufs

    VMEM_BUDGET = 12 << 20     # fits v5e's 16 MiB default scoped VMEM w/ margin
    while _vmem_bytes(ts) > VMEM_BUDGET and ts > 16:
        ts = max(16, _round_up(ts // 2, 16))

    S_pad = _round_up(S, ts)
    n_s = S_pad // ts

    # ---- glue (one fused pass each): patch extract + cast + pad, weight, pos ----
    # (B, C, Hp, P, Wp, P) -> (B, Hp, Wp, C, P, P) -> (B, Np, K), K ordered
    # (c, ph, pw) to match nn.Conv2d weight flattening.
    # TODO(synk): patch extraction still runs as one XLA transpose outside the
    # kernel; accepting NHWC upstream (or in-kernel DMA gather of patch rows)
    # would remove that extra HBM pass.
    patches = pixel_values.astype(compute_dtype).reshape(B, C, Hp, P, Wp, P)
    patches = jnp.transpose(patches, (0, 2, 4, 1, 3, 5)).reshape(B, Np, K)
    # zero "class" row at seq position 0 + seq/K zero padding in a single pad
    patches_aug = jnp.pad(patches, ((0, 0), (1, S_pad - S), (0, K_pad - K)))

    w_flat = conv_weight.reshape(D, K).T.astype(compute_dtype)        # (K, D)
    w_aug = jnp.pad(w_flat, ((0, K_pad - K), (0, D_pad - D)))

    # fold class embedding into position row 0 (f32 add path)
    pos = position_embedding.astype(jnp.float32)
    pos = pos.at[0].add(class_embedding.astype(jnp.float32))
    pos_aug = jnp.pad(pos, ((0, S_pad - S), (0, D_pad - D)))

    # ---- honest cost estimate (weight/pos are NOT re-fetched per image) ----
    cost = pl.CostEstimate(
        flops=2 * B * S_pad * K_pad * D_pad,
        transcendentals=0,
        bytes_accessed=(n_d * B * S_pad * K_pad * 2                    # patches
                        + (1 if n_d == 1 else n_s * n_d) * K_pad * tn * 2  # weight
                        + S_pad * D_pad * 4                            # pos (once)
                        + B * S_pad * D_pad * out_isz))                # output

    cparams = dict(dimension_semantics=("parallel", "parallel", "parallel"))
    est = _vmem_bytes(ts)
    if est > VMEM_BUDGET:              # only for unusually large configs
        cparams["vmem_limit_bytes"] = int(est + (4 << 20))

    out_full = pl.pallas_call(
        _embed_kernel,
        out_shape=jax.ShapeDtypeStruct((B, S_pad, D_pad), out_dtype),
        grid_spec=pltpu.PrefetchScalarGridSpec(
            num_scalar_prefetch=0,
            # batch innermost: weight & pos block indices unchanged across
            # consecutive steps -> Pallas skips their re-fetch.
            grid=(n_s, n_d, B),
            in_specs=[
                pl.BlockSpec((1, ts, K_pad), lambda s, j, b: (b, s, 0)),
                _spec((K_pad, tn), lambda s, j, b: (0, j),
                      single_buffer=(n_d == 1)),
                _spec((ts, tn), lambda s, j, b: (s, j),
                      single_buffer=(n_s == 1 and n_d == 1)),
            ],
            out_specs=pl.BlockSpec((1, ts, tn), lambda s, j, b: (b, s, j)),
        ),
        compiler_params=pltpu.CompilerParams(**cparams),
        cost_estimate=cost,
    )(patches_aug, w_aug, pos_aug)

    if slice_output and (S_pad != S or D_pad != D):
        # NOTE: this slice is an extra HBM copy; pass slice_output=False to
        # consume the padded buffer directly.
        return out_full[:, :S, :D]
    return out_full


if __name__ == "__main__":
    # Config-like small shapes: image_size=16, patch_size=4, num_channels=4, hidden=32
    B, C, H, W = 2, 4, 16, 16
    P = 4
    D = 32
    Np = (H // P) * (W // P)          # 16
    num_positions = Np + 1            # 17

    key = jax.random.PRNGKey(0)
    k1, k2, k3, k4 = jax.random.split(key, 4)
    pixel_values = jax.random.normal(k1, (B, C, H, W), dtype=jnp.float32)
    conv_weight = jax.random.normal(k2, (D, C, P, P), dtype=jnp.float32) * 0.02
    class_embedding = jax.random.normal(k3, (D,), dtype=jnp.float32)
    position_embedding = jax.random.normal(k4, (num_positions, D), dtype=jnp.float32)

    out = partclipseg_vision_embeddings(
        pixel_values, conv_weight, class_embedding, position_embedding, P)
    out = jax.block_until_ready(out)

    # reference in plain JAX (matching bf16 input cast, f32 accumulation)
    patches_ref = jnp.transpose(
        pixel_values.reshape(B, C, H // P, P, W // P, P),
        (0, 2, 4, 1, 3, 5)).reshape(B, Np, C * P * P)
    w_flat_ref = conv_weight.reshape(D, -1).T
    pe_ref = (patches_ref.astype(jnp.bfloat16).astype(jnp.float32)
              @ w_flat_ref.astype(jnp.bfloat16).astype(jnp.float32))
    ref = jnp.concatenate(
        [jnp.broadcast_to(class_embedding, (B, 1, D)), pe_ref], axis=1)
    ref = ref + position_embedding[None, :, :]

    assert out.shape == (B, num_positions, D)
    assert out.dtype == pixel_values.dtype
    assert jnp.allclose(out, ref, atol=2e-2, rtol=2e-2)

    print("KERNEL_OK")
</pallas_src>

<mosaic_0001>
module attributes {stable_mosaic.version = 11 : i64} {
  func.func @_embed_kernel(%arg0: i32, %arg1: i32, %arg2: i32, %arg3: memref<1x32x128xbf16, #tpu.memory_space<vmem>>, %arg4: memref<128x128xbf16, #tpu.memory_space<vmem>>, %arg5: memref<32x128xf32, #tpu.memory_space<vmem>>, %arg6: memref<1x32x128xf32, #tpu.memory_space<vmem>>) attributes {dimension_semantics = [#tpu.dimension_semantics<parallel>, #tpu.dimension_semantics<parallel>, #tpu.dimension_semantics<parallel>], iteration_bounds = array<i64: 1, 1, 2>, scalar_prefetch = 0 : i64, scratch_operands = 0 : i64, tpu.core_type = #tpu.core_type<tc>, window_params = [{transform_indices = @transform_0, window_bounds = array<i64: 1, 32, 128>}, {pipeline_mode = #tpu.pipeline_mode<synchronous>, transform_indices = @transform_1, window_bounds = array<i64: 128, 128>}, {pipeline_mode = #tpu.pipeline_mode<synchronous>, transform_indices = @transform_2, window_bounds = array<i64: 32, 128>}, {transform_indices = @transform_3, window_bounds = array<i64: 1, 32, 128>}]} {
    %c0 = arith.constant 0 : index
    %c0_0 = arith.constant 0 : index
    %c0_1 = arith.constant 0 : index
    %0 = vector.load %arg3[%c0, %c0_0, %c0_1] : memref<1x32x128xbf16, #tpu.memory_space<vmem>>, vector<1x32x128xbf16>
    %1 = vector.shape_cast %0 : vector<1x32x128xbf16> to vector<32x128xbf16>
    %c0_2 = arith.constant 0 : index
    %c0_3 = arith.constant 0 : index
    %2 = vector.load %arg4[%c0_2, %c0_3] : memref<128x128xbf16, #tpu.memory_space<vmem>>, vector<128x128xbf16>
    %cst = arith.constant dense<0.000000e+00> : vector<32x128xf32>
    %3 = tpu.matmul %1, %2, %cst {dimension_numbers = #tpu.dot_dimension_numbers<[1], [0], [0], [1], [0, 0, 1, 1], [], []>} : vector<32x128xbf16>, vector<128x128xbf16>, vector<32x128xf32> -> vector<32x128xf32>
    %c0_4 = arith.constant 0 : index
    %c0_5 = arith.constant 0 : index
    %4 = vector.load %arg5[%c0_4, %c0_5] : memref<32x128xf32, #tpu.memory_space<vmem>>, vector<32x128xf32>
    %5 = arith.addf %3, %4 : vector<32x128xf32>
    %c0_6 = arith.constant 0 : index
    %c0_7 = arith.constant 0 : index
    %c0_8 = arith.constant 0 : index
    %6 = vector.load %arg6[%c0_6, %c0_7, %c0_8] : memref<1x32x128xf32, #tpu.memory_space<vmem>>, vector<1x32x128xf32>
    %7 = vector.shape_cast %6 : vector<1x32x128xf32> to vector<32x128xf32>
    %8 = vector.shape_cast %5 : vector<32x128xf32> to vector<1x32x128xf32>
    tpu.vector_store %arg6[%c0_6, %c0_7, %c0_8], %8 {strides = array<i32>} : memref<1x32x128xf32, #tpu.memory_space<vmem>>, vector<1x32x128xf32>,
    return
  }
  func.func @transform_0(%arg0: i32, %arg1: i32, %arg2: i32) -> (i32, i32, i32) {
    %c0_i32 = arith.constant 0 : i32
    %c0_i32_0 = arith.constant 0 : i32
    return %arg2, %arg0, %c0_i32 : i32, i32, i32
  }
  func.func @transform_1(%arg0: i32, %arg1: i32, %arg2: i32) -> (i32, i32) {
    %c0_i32 = arith.constant 0 : i32
    %c0_i32_0 = arith.constant 0 : i32
    return %c0_i32, %arg1 : i32, i32
  }
  func.func @transform_2(%arg0: i32, %arg1: i32, %arg2: i32) -> (i32, i32) {
    %c0_i32 = arith.constant 0 : i32
    return %arg0, %arg1 : i32, i32
  }
  func.func @transform_3(%arg0: i32, %arg1: i32, %arg2: i32) -> (i32, i32, i32) {
    %c0_i32 = arith.constant 0 : i32
    return %arg2, %arg0, %arg1 : i32, i32, i32
  }
}

</mosaic_0001>

<llo_original>
// kernel: tpu_custom_call.1
$region0: #{tpu_custom_call.1}
  #allocation0 [shape = 'u32[]', space=smem, size = 0x4, offset = 0x4, fixed_abs, tag = 'smem constant byte address 0x4 - core index']
  #allocation1 [shape = 'u32[144,128]{1,0:T(1,128)}', space=vmem, size = 0x12000, scoped, tag = 'internal scratch']
  %s0 = inlined_call_operand.hbm [shape: bf16[2,32,128], index: 0, kind: input, shape index: {}]
  %s1 = inlined_call_operand.hbm [shape: bf16[128,128], index: 1, kind: input, shape index: {}]
  %s2 = inlined_call_operand.hbm [shape: f32[32,128], index: 2, kind: input, shape index: {}]
  %s3 = inlined_call_operand.hbm [shape: f32[2,32,128], index: 3, kind: output, shape index: {}]
  %s4 = sld [smem:[#allocation0]]
  $region57: #{tpu_custom_call.1} parent=0
    _
  %s6 = ssub.s32 1, %s4
  %s7 = scalar_select 0, %s6, %s4
  $region1: #{tpu_custom_call.1} parent=0
    #allocation2 [shape = 'u8[16384]{0}', space=vmem, size = 0x4000, scoped, tag = 'input window, operand 0']
    #allocation3 [shape = 's32[2]{0}', space=sflag, size = 0x8, scoped, tag = 'scoped memory for tpu_custom_call.1']
    #allocation4 [shape = 's32[2]{0}', space=sflag, size = 0x8, scoped, tag = 'scoped memory for tpu_custom_call.1']
    #allocation5 [shape = 'u8[32768]{0}', space=vmem, size = 0x8000, scoped, tag = 'input window, operand 1, single buffered']
    #allocation6 [shape = 's32[1]{0}', space=sflag, size = 0x4, scoped, tag = 'scoped memory for tpu_custom_call.1']
    #allocation7 [shape = 'u8[16384]{0}', space=vmem, size = 0x4000, scoped, tag = 'input window, operand 2, single buffered']
    #allocation8 [shape = 'u8[32768]{0}', space=vmem, size = 0x8000, scoped, tag = 'output window, operand 0']
    %8 = vsyncpa [#allocation3], 0
    %s9 = scalar_lea.sflag [#allocation3], 1
    %10 = vsyncpa %s9, 0
    %11 = vsyncpa [#allocation6], 0
    %12 = vsyncpa [#allocation4], 0
    %s13 = scalar_lea.sflag [#allocation4], 1
    %14 = vsyncpa %s13, 0
    loop: start=0, step=1, limit=4
    $region2: #{tpu_custom_call.1} parent=1 // loop_pre_header
      _
    $region3: #{tpu_custom_call.1} parent=1 // loop_header
      %s16 = sphi 0, %s20
      %p17 = scmp.ge.s32.totalorder %s16, 4
      %s23 = sphi 0, %s42
      %s24 = sphi 0, %s38
      %s25 = sphi 0, %s34
      %s26 = sphi 0, %s23
      %s27 = sphi 0, %s24
      %s28 = sphi 0, %s25
      %s29 = sphi 0, %s26
      %s30 = sphi 0, %s27
      %s31 = sphi 0, %s28
      %s47 = sphi 0, %s49
      %s50 = sphi 0, %s47
      %s51 = sphi 0, %s50
      %s67 = sphi 0, %s51
      %s73 = sphi 0, %s75
      %s76 = sphi 0, %s73
      %s77 = sphi 0, %s76
      %s93 = sphi 0, %s77
      %s101 = sphi 0, %s103
      %s104 = sphi 0, %s101
      %s105 = sphi 0, %s104
      %s121 = sphi 0, %s105
      %s131 = sphi 0, %s133
      %s134 = sphi 0, %s131
      %s135 = sphi 0, %s134
      %s151 = sphi 0, %s135
    $region4: #{tpu_custom_call.1} parent=1 // loop_header_branch
      %19 = sbr.rel (%p17) target = $region8
    $region5: #{tpu_custom_call.1} parent=1 // loop_body
      %s21 = ssub.s32 %s16, 1
      %s22 = ssub.s32 %s16, 2
      %s32 = sadd.s32 1, %s25
      %p33 = scmp.ge.s32.totalorder %s32, 2
      %s34 = scalar_select %p33, 0, %s32
      %s35 = sadd.s32 1, %s24
      %s36 = scalar_select %p33, %s35, %s24
      %p37 = scmp.ge.s32.totalorder %s36, 1
      %s38 = scalar_select %p37, 0, %s36
      %s39 = sadd.s32 1, %s23
      %s40 = scalar_select %p37, %s39, %s23
      %p41 = scmp.ge.s32.totalorder %s40, 1
      %s42 = scalar_select %p41, 0, %s40
      %s43 = ssub.s32 %s25, %s34
      %s44 = ssub.s32 %s23, %s42
      %s45 = sor.u32 %s43, %s44
      %p46 = scmp.eq.s32.totalorder %s45, 0
      %s48 = sadd.s32 %s47, 1
      %s49 = scalar_select %p46, %s47, %s48
      %p52 = pneg %p46
      %p53 = scmp.eq.s32.totalorder %s16, 1
      %p54 = por %p52, %p53
      %p55 = scmp.ne.s32.totalorder %s47, %s50
      %p56 = scmp.eq.s32.totalorder %s16, 0
      %p57 = por %p55, %p56
      %p58 = scmp.ne.s32.totalorder %s47, %s50
      %p59 = scmp.eq.s32.totalorder %s21, 1
      %p60 = por %p58, %p59
      %p61 = scmp.ne.s32.totalorder %s50, %s51
      %p62 = scmp.eq.s32.totalorder %s21, 0
      %p63 = por %p61, %p62
      %p64 = scmp.ne.s32.totalorder %s50, %s51
      %p65 = scmp.eq.s32.totalorder %s22, 1
      %p66 = por %p64, %p65
      %p68 = scmp.ne.s32.totalorder %s51, %s67
      %p69 = scmp.eq.s32.totalorder %s22, 0
      %p70 = por %p68, %p69
      %s71 = ssub.s32 %s24, %s38
      %p72 = scmp.eq.s32.totalorder %s71, 0
      %s74 = sadd.s32 %s73, 1
      %s75 = scalar_select %p72, %s73, %s74
      %p78 = pneg %p72
      %p79 = scmp.eq.s32.totalorder %s16, 1
      %p80 = por %p78, %p79
      %p81 = scmp.ne.s32.totalorder %s73, %s76
      %p82 = scmp.eq.s32.totalorder %s16, 0
      %p83 = por %p81, %p82
      %p84 = scmp.ne.s32.totalorder %s73, %s76
      %p85 = scmp.eq.s32.totalorder %s21, 1
      %p86 = por %p84, %p85
      %p87 = scmp.ne.s32.totalorder %s76, %s77
      %p88 = scmp.eq.s32.totalorder %s21, 0
      %p89 = por %p87, %p88
      %p90 = scmp.ne.s32.totalorder %s76, %s77
      %p91 = scmp.eq.s32.totalorder %s22, 1
      %p92 = por %p90, %p91
      %p94 = scmp.ne.s32.totalorder %s77, %s93
      %p95 = scmp.eq.s32.totalorder %s22, 0
      %p96 = por %p94, %p95
      %s97 = ssub.s32 %s23, %s42
      %s98 = ssub.s32 %s24, %s38
      %s99 = sor.u32 %s97, %s98
      %p100 = scmp.eq.s32.totalorder %s99, 0
      %s102 = sadd.s32 %s101, 1
      %s103 = scalar_select %p100, %s101, %s102
      %p106 = pneg %p100
      %p107 = scmp.eq.s32.totalorder %s16, 1
      %p108 = por %p106, %p107
      %p109 = scmp.ne.s32.totalorder %s101, %s104
      %p110 = scmp.eq.s32.totalorder %s16, 0
      %p111 = por %p109, %p110
      %p112 = scmp.ne.s32.totalorder %s101, %s104
      %p113 = scmp.eq.s32.totalorder %s21, 1
      %p114 = por %p112, %p113
      %p115 = scmp.ne.s32.totalorder %s104, %s105
      %p116 = scmp.eq.s32.totalorder %s21, 0
      %p117 = por %p115, %p116
      %p118 = scmp.ne.s32.totalorder %s104, %s105
      %p119 = scmp.eq.s32.totalorder %s22, 1
      %p120 = por %p118, %p119
      %p122 = scmp.ne.s32.totalorder %s105, %s121
      %p123 = scmp.eq.s32.totalorder %s22, 0
      %p124 = por %p122, %p123
      %s125 = ssub.s32 %s25, %s34
      %s126 = ssub.s32 %s23, %s42
      %s127 = sor.u32 %s125, %s126
      %s128 = ssub.s32 %s24, %s38
      %s129 = sor.u32 %s127, %s128
      %p130 = scmp.eq.s32.totalorder %s129, 0
      %s132 = sadd.s32 %s131, 1
      %s133 = scalar_select %p130, %s131, %s132
      %p136 = pneg %p130
      %p137 = scmp.eq.s32.totalorder %s16, 1
      %p138 = por %p136, %p137
      %p139 = scmp.ne.s32.totalorder %s131, %s134
      %p140 = scmp.eq.s32.totalorder %s16, 0
      %p141 = por %p139, %p140
      %p142 = scmp.ne.s32.totalorder %s131, %s134
      %p143 = scmp.eq.s32.totalorder %s21, 1
      %p144 = por %p142, %p143
      %p145 = scmp.ne.s32.totalorder %s134, %s135
      %p146 = scmp.eq.s32.totalorder %s21, 0
      %p147 = por %p145, %p146
      %p148 = scmp.ne.s32.totalorder %s134, %s135
      %p149 = scmp.eq.s32.totalorder %s22, 1
      %p150 = por %p148, %p149
      %p152 = scmp.ne.s32.totalorder %s135, %s151
      %p153 = scmp.eq.s32.totalorder %s22, 0
      %p154 = por %p152, %p153
      %p155 = scmp.le.s32.totalorder 1, %s16
      %p156 = scmp.lt.s32.totalorder %s16, 3
      %p157 = pnand %p155, %p156
      %p158 = pneg %p157
      // Predicated region
      $region9: #{tpu_custom_call.1} parent=5 // pred_check
        _
      $region10: #{tpu_custom_call.1} parent=5 // pred_check_branch
        %160 = sbr.rel (%p157) target = $region12
      $region11: #{tpu_custom_call.1} parent=5 // pred_region
        %s161 = ssub.s32 %s16, 1
        // Predicated region
        $region13: #{tpu_custom_call.1} parent=11 // pred_check
          %p162 = pneg %p89
        $region14: #{tpu_custom_call.1} parent=11 // pred_check_branch
          %164 = sbr.rel (%p162) target = $region16
        $region15: #{tpu_custom_call.1} parent=11 // pred_region
          %s166 = ssub.s32 1024, 1024
          %167 = vsyncadd [#allocation6], %s166
          %s168 = smul.addr %s27, 64
          %s169 = scalar_lea.hbm %s1, %s168
          %s170 = sshll.u32 [#allocation5], 4
          %s171 = int_to_ptr.vmem [resolvable:$true] %s170
          %176 = dma.hbm_to_vmem [thread:$0]  %s169, 1024, %s171, [#allocation6], 64, 64, 4
        $region16: #{tpu_custom_call.1} parent=11 // pred_fallthru
          _
        // Predicated region
        $region17: #{tpu_custom_call.1} parent=11 // pred_check
          %p177 = pneg %p117
        $region18: #{tpu_custom_call.1} parent=11 // pred_check_branch
          %179 = sbr.rel (%p177) target = $region20
        $region19: #{tpu_custom_call.1} parent=11 // pred_region
          %s180 = smul.u32 4, %s26
          %s182 = ssub.s32 512, 512
          %183 = vsyncadd [#allocation6], %s182
          %s184 = sadd.s32 %s27, %s180
          %s185 = smul.addr %s184, 128
          %s186 = scalar_lea.hbm %s2, %s185
          %s187 = sshll.u32 [#allocation7], 4
          %s188 = int_to_ptr.vmem [resolvable:$true] %s187
          %193 = dma.hbm_to_vmem [thread:$0]  %s186, 512, %s188, [#allocation6], 128, 128, 8
        $region20: #{tpu_custom_call.1} parent=11 // pred_fallthru
          _
      $region12: #{tpu_custom_call.1} parent=5 // pred_fallthru
        _
      %p194 = scmp.lt.s32.totalorder %s16, 2
      // Predicated region
      $region21: #{tpu_custom_call.1} parent=5 // pred_check
        %p195 = pneg %p194
      $region22: #{tpu_custom_call.1} parent=5 // pred_check_branch
        %197 = sbr.rel (%p195) target = $region24
      $region23: #{tpu_custom_call.1} parent=5 // pred_region
        // Predicated region
        $region25: #{tpu_custom_call.1} parent=23 // pred_check
          %p198 = pneg %p57
        $region26: #{tpu_custom_call.1} parent=23 // pred_check_branch
          %200 = sbr.rel (%p198) target = $region28
        $region27: #{tpu_custom_call.1} parent=23 // pred_region
          %s201 = sand.u32 %s47, 1
          %s202 = scalar_lea.sflag [#allocation3], %s201
          %s203 = sand.u32 %s47, 1
          %s204 = smul.addr %s203, 16
          %s205 = scalar_lea.vmem [#allocation2], %s204
          %s206 = smul.u32 4, %s23
          %s208 = ssub.s32 256, 256
          %209 = vsyncadd %s202, %s208
          %s210 = smul.addr %s25, 4
          %s211 = sadd.s32 %s206, %s210
          %s212 = smul.addr %s211, 64
          %s213 = scalar_lea.hbm %s0, %s212
          %s214 = sshll.u32 %s205, 4
          %s215 = int_to_ptr.vmem [resolvable:$true] %s214
          %220 = dma.hbm_to_vmem [thread:$0]  %s213, 256, %s215, %s202, 64, 64, 4
        $region28: #{tpu_custom_call.1} parent=23 // pred_fallthru
          _
      $region24: #{tpu_custom_call.1} parent=5 // pred_fallthru
        _
      %p221 = scmp.le.s32.totalorder 1, %s16
      %p222 = scmp.lt.s32.totalorder %s16, 3
      %p223 = pnand %p221, %p222
      %p224 = pneg %p223
      // Predicated region
      $region29: #{tpu_custom_call.1} parent=5 // pred_check
        _
      $region30: #{tpu_custom_call.1} parent=5 // pred_check_branch
        %226 = sbr.rel (%p223) target = $region32
      $region31: #{tpu_custom_call.1} parent=5 // pred_region
        %s227 = ssub.s32 %s16, 1
        %s228 = sand.u32 %s50, 1
        %s229 = scalar_lea.sflag [#allocation3], %s228
        %s230 = sand.u32 %s50, 1
        %s231 = smul.addr %s230, 16
        %s232 = scalar_lea.vmem [#allocation2], %s231
        // Predicated region
        $region33: #{tpu_custom_call.1} parent=31 // pred_check
          %p233 = pneg %p63
        $region34: #{tpu_custom_call.1} parent=31 // pred_check_branch
          %235 = sbr.rel (%p233) target = $region36
        $region35: #{tpu_custom_call.1} parent=31 // pred_region
          %236 = dma.done %s229, 256
        $region36: #{tpu_custom_call.1} parent=31 // pred_fallthru
          _
        // Predicated region
        $region37: #{tpu_custom_call.1} parent=31 // pred_check
          %p237 = pneg %p89
        $region38: #{tpu_custom_call.1} parent=31 // pred_check_branch
          %239 = sbr.rel (%p237) target = $region40
        $region39: #{tpu_custom_call.1} parent=31 // pred_region
          %240 = dma.done [#allocation6], 1024
        $region40: #{tpu_custom_call.1} parent=31 // pred_fallthru
          _
        // Predicated region
        $region41: #{tpu_custom_call.1} parent=31 // pred_check
          %p241 = pneg %p117
        $region42: #{tpu_custom_call.1} parent=31 // pred_check_branch
          %243 = sbr.rel (%p241) target = $region44
        $region43: #{tpu_custom_call.1} parent=31 // pred_region
          %244 = dma.done [#allocation6], 512
        $region44: #{tpu_custom_call.1} parent=31 // pred_fallthru
          _
        %s245 = sand.u32 %s50, 1
        %s246 = scalar_lea.sflag [#allocation3], %s245
        %s247 = sand.u32 %s50, 1
        %s248 = smul.addr %s247, 16
        %s249 = scalar_lea.vmem [#allocation2], %s248
        %p250 = pneg %p63
        %p251 = pneg %p60
        %p252 = pneg %p89
        %p253 = pneg %p86
        %p254 = pneg %p117
        %p255 = pneg %p114
        %p256 = pneg %p147
        %p257 = pneg %p144
        %s258 = sand.u32 %s134, 1
        %s259 = scalar_lea.sflag [#allocation4], %s258
        %s260 = sand.u32 %s134, 1
        %s261 = smul.addr %s260, 32
        %s262 = scalar_lea.vmem [#allocation8], %s261
        %s263 = smul.u32 4, %s26
        %s264 = smul.u32 4, %s26
        %s265 = smul.u32 4, %s26
        %v267 = vld [vmem:[%s232] sm:$0xf]
        %v268 = vld [vmem:[%s232 + $0x4] sm:$0xf]
        %v269 = vld [vmem:[%s232 + $0x8] sm:$0xf]
        %v270 = vld [vmem:[%s232 + $0xc] sm:$0xf]
        %v271 = vld [vmem:[#allocation5] sm:$0xf]
        %v272 = vld [vmem:[#allocation5 + $0x4] sm:$0xf]
        %v273 = vld [vmem:[#allocation5 + $0x8] sm:$0xf]
        %v274 = vld [vmem:[#allocation5 + $0xc] sm:$0xf]
        %v275 = vld [vmem:[#allocation5 + $0x10] sm:$0xf]
        %v276 = vld [vmem:[#allocation5 + $0x14] sm:$0xf]
        %v277 = vld [vmem:[#allocation5 + $0x18] sm:$0xf]
        %v278 = vld [vmem:[#allocation5 + $0x1c] sm:$0xf]
        %v279 = vld [vmem:[#allocation5 + $0x20] sm:$0xf]
        %v280 = vld [vmem:[#allocation5 + $0x24] sm:$0xf]
        %v281 = vld [vmem:[#allocation5 + $0x28] sm:$0xf]
        %v282 = vld [vmem:[#allocation5 + $0x2c] sm:$0xf]
        %v283 = vld [vmem:[#allocation5 + $0x30] sm:$0xf]
        %v284 = vld [vmem:[#allocation5 + $0x34] sm:$0xf]
        %v285 = vld [vmem:[#allocation5 + $0x38] sm:$0xf]
        %v286 = vld [vmem:[#allocation5 + $0x3c] sm:$0xf]
        %v287 = vld [vmem:[#allocation7] sm:$0xff]
        %v288 = vld [vmem:[#allocation7 + $0x8] sm:$0xff]
        %v289 = vld [vmem:[#allocation7 + $0x10] sm:$0xff]
        %v290 = vld [vmem:[#allocation7 + $0x18] sm:$0xff]
        %v295 = vunpack.c.l.b16 %v267
        %v296 = vunpack.c.l.b16 %v268
        %v297 = vunpack.c.l.b16 %v269
        %v298 = vunpack.c.l.b16 %v270
        %v299 = vpack.c.b16 %v296, %v295
        %v300 = vpack.c.b16 %v298, %v297
        %v319 = vunpack.c.l.b16 %v271
        %v320 = vunpack.c.l.b16 %v272
        %v321 = vunpack.c.l.b16 %v273
        %v322 = vunpack.c.l.b16 %v274
        %v323 = vunpack.c.l.b16 %v275
        %v324 = vunpack.c.l.b16 %v276
        %v325 = vunpack.c.l.b16 %v277
        %v326 = vunpack.c.l.b16 %v278
        %v327 = vunpack.c.l.b16 %v279
        %v328 = vunpack.c.l.b16 %v280
        %v329 = vunpack.c.l.b16 %v281
        %v330 = vunpack.c.l.b16 %v282
        %v331 = vunpack.c.l.b16 %v283
        %v332 = vunpack.c.l.b16 %v284
        %v333 = vunpack.c.l.b16 %v285
        %v334 = vunpack.c.l.b16 %v286
        %v335 = vpack.c.b16 %v320, %v319
        %v336 = vpack.c.b16 %v322, %v321
        %v337 = vpack.c.b16 %v324, %v323
        %v338 = vpack.c.b16 %v326, %v325
        %v339 = vpack.c.b16 %v328, %v327
        %v340 = vpack.c.b16 %v330, %v329
        %v341 = vpack.c.b16 %v332, %v331
        %v342 = vpack.c.b16 %v334, %v333
        %351 = vmatprep.subr.bf16.mxu0 0
        %352 = vmatpush1.bf16.msra.mxu0 %v335
        %353 = vmatprep.subr.bf16.mxu0 0
        %354 = vmatpush1.bf16.msra.mxu0 %v336
        %355 = vmatprep.subr.bf16.mxu0 0
        %356 = vmatpush1.bf16.msra.mxu0 %v337
        %357 = vmatprep.subr.bf16.mxu0 0
        %358 = vmatpush1.bf16.msra.mxu0 %v338
        %359 = vmatprep.subr.bf16.mxu0 0
        %360 = vmatpush1.bf16.msra.mxu0 %v339
        %361 = vmatprep.subr.bf16.mxu0 0
        %362 = vmatpush1.bf16.msra.mxu0 %v340
        %363 = vmatprep.subr.bf16.mxu0 0
        %364 = vmatpush1.bf16.msra.mxu0 %v341
        %365 = vmatprep.subr.bf16.mxu0 0
        %366 = vmatpush1.bf16.msra.mxu0 %v342
        %367 = vmatprep.subr.bf16.mxu0 0
        %368 = vmatpush1.bf16.msra.mxu0 0
        %369 = vmatprep.subr.bf16.mxu0 0
        %370 = vmatpush1.bf16.msra.mxu0 0
        %371 = vmatprep.subr.bf16.mxu0 0
        %372 = vmatpush1.bf16.msra.mxu0 0
        %373 = vmatprep.subr.bf16.mxu0 0
        %374 = vmatpush1.bf16.msra.mxu0 0
        %375 = vmatprep.subr.bf16.mxu0 0
        %376 = vmatpush1.bf16.msra.mxu0 0
        %377 = vmatprep.subr.bf16.mxu0 0
        %378 = vmatpush1.bf16.msra.mxu0 0
        %379 = vmatprep.subr.bf16.mxu0 0
        %380 = vmatpush1.bf16.msra.mxu0 0
        %381 = vmatprep.subr.bf16.mxu0 0
        %382 = vmatpush1.bf16.msra.mxu0 0
        %383 = vmatprep.mubr.bf16.mxu0 0
        %384 = vmatmul.mubr.bf16.gmra.mrb[0].mxu0 %v299
        %v385 = vpop.f32.mrb[0].mxu0
        %v386 = vadd.f32 %v287, %v385
        %v387 = vpop.f32.mrb[0].mxu0
        %v388 = vpop.f32.mrb[0].mxu0
        %v389 = vadd.f32 %v288, %v388
        %v390 = vpop.f32.mrb[0].mxu0
        %391 = vmatprep.mubr.bf16.mxu0 0
        %392 = vmatmul.mubr.bf16.gmra.mrb[0].mxu0 %v300
        %v393 = vpop.f32.mrb[0].mxu0
        %v394 = vadd.f32 %v289, %v393
        %v395 = vpop.f32.mrb[0].mxu0
        %v396 = vpop.f32.mrb[0].mxu0
        %v397 = vadd.f32 %v290, %v396
        %v398 = vpop.f32.mrb[0].mxu0
        %399 = vdwg.mxu0
        %400 = vst [vmem:[%s262] sm:$0xff] %v386
        %401 = vst [vmem:[%s262 + $0x8] sm:$0xff] %v389
        %402 = vst [vmem:[%s262 + $0x10] sm:$0xff] %v394
        %403 = vst [vmem:[%s262 + $0x18] sm:$0xff] %v397
        %s404 = sand.u32 %s134, 1
        %s405 = scalar_lea.sflag [#allocation4], %s404
        %s406 = sand.u32 %s134, 1
        %s407 = smul.addr %s406, 32
        %s408 = scalar_lea.vmem [#allocation8], %s407
        // Predicated region
        $region45: #{tpu_custom_call.1} parent=31 // pred_check
          %p409 = pneg %p144
        $region46: #{tpu_custom_call.1} parent=31 // pred_check_branch
          %411 = sbr.rel (%p409) target = $region48
        $region47: #{tpu_custom_call.1} parent=31 // pred_region
          %s412 = smul.u32 4, %s26
          %s414 = ssub.s32 512, 512
          %415 = vsyncadd %s405, %s414
          %s416 = sadd.s32 %s27, %s412
          %s417 = smul.addr %s28, 4
          %s418 = sadd.s32 %s416, %s417
          %s419 = smul.addr %s418, 128
          %s420 = scalar_lea.hbm %s3, %s419
          %s421 = sshll.u32 %s408, 4
          %s422 = int_to_ptr.vmem [resolvable:$true] %s421
          %427 = dma.vmem_to_hbm [thread:$0]  %s422, 512, %s420, %s405, 128, 128, 8
        $region48: #{tpu_custom_call.1} parent=31 // pred_fallthru
          _
      $region32: #{tpu_custom_call.1} parent=5 // pred_fallthru
        _
      %p428 = scmp.le.s32.totalorder 2, %s16
      // Predicated region
      $region49: #{tpu_custom_call.1} parent=5 // pred_check
        %p429 = pneg %p428
      $region50: #{tpu_custom_call.1} parent=5 // pred_check_branch
        %431 = sbr.rel (%p429) target = $region52
      $region51: #{tpu_custom_call.1} parent=5 // pred_region
        %s432 = ssub.s32 %s16, 2
        // Predicated region
        $region53: #{tpu_custom_call.1} parent=51 // pred_check
          %p433 = pneg %p150
        $region54: #{tpu_custom_call.1} parent=51 // pred_check_branch
          %435 = sbr.rel (%p433) target = $region56
        $region55: #{tpu_custom_call.1} parent=51 // pred_region
          %s436 = sand.u32 %s135, 1
          %s437 = scalar_lea.sflag [#allocation4], %s436
          %s438 = sand.u32 %s135, 1
          %s439 = smul.addr %s438, 32
          %s440 = scalar_lea.vmem [#allocation8], %s439
          %441 = dma.done %s437, 512
        $region56: #{tpu_custom_call.1} parent=51 // pred_fallthru
          _
      $region52: #{tpu_custom_call.1} parent=5 // pred_fallthru
        _
    $region6: #{tpu_custom_call.1} parent=1 // loop_footer
      %s20 = sadd.s32 1, %s16
    $region7: #{tpu_custom_call.1} parent=1 // loop_footer_branch
      %15 = sbr.rel target = $region3
    $region8: #{tpu_custom_call.1} parent=1 // loop_exit
      _
    %442 = vsyncpa [#allocation3], 1
    %s443 = scalar_lea.sflag [#allocation3], 1
    %444 = vsyncpa %s443, 1
    %445 = vsyncpa [#allocation6], 1
    %446 = vsyncpa [#allocation4], 1
    %s447 = scalar_lea.sflag [#allocation4], 1
    %448 = vsyncpa %s447, 1

</llo_original>
